<compile_context>
chip_gen: v7x
topology: tpu7x:2x2x1
jax: 0.10.0
libtpu: 0.0.40
codegen_flags: <defaults>
</compile_context>

<pallas_src>
import functools

import jax
import jax.numpy as jnp
from jax import lax
from jax.experimental import pallas as pl
from jax.experimental.pallas import tpu as pltpu


# ---------------------------------------------------------------------------
# Kernel
# ---------------------------------------------------------------------------
def _attn_kernel(q_ref, enc_ref, out_ref, stage_ref, acc_ref, *, ss, s_total):
    # q_ref:     (tb, H)            f32, folded query (hidden @ W), resident per batch tile
    # enc_ref:   (s_blk, tb, H)     encoder outputs (native layout), streamed over S
    # out_ref:   (num_s, tb, s_blk) f32 output block, written only on the last S step
    # stage_ref: (s_blk, tb)        f32 scratch: energies of the current S chunk
    # acc_ref:   (num_s, tb, s_blk) f32 scratch: energies of all S chunks (this batch tile)
    num_s, tb, s_blk = acc_ref.shape
    j = pl.program_id(1)

    q = q_ref[...].astype(jnp.float32)                       # (tb, H)

    n_sub = enc_ref.shape[0] // ss

    def sub(k, carry):
        off = pl.multiple_of(k * ss, ss)
        enc_sub = enc_ref[pl.ds(off, ss), :, :].astype(jnp.float32)   # (ss, tb, H)
        # e[s, b] = sum_h enc[s, b, h] * q[b, h]  (VPU multiply + lane reduce)
        stage_ref[pl.ds(off, ss), :] = jnp.sum(enc_sub * q[None, :, :], axis=-1)
        return carry

    lax.fori_loop(0, n_sub, sub, 0)

    # One small (s_blk, tb) -> (tb, s_blk) transpose per chunk puts energies in
    # the lane-dense layout; dynamic leading-axis store into the accumulator.
    acc_ref[pl.ds(j, 1)] = stage_ref[...].T[None]

    @pl.when(j == num_s - 1)
    def _():
        e = acc_ref[...]                                      # (num_s, tb, s_blk)
        if num_s * s_blk != s_total:                          # static: mask padded seq slots
            sid = (lax.broadcasted_iota(jnp.int32, (num_s, 1, s_blk), 0) * s_blk
                   + lax.broadcasted_iota(jnp.int32, (num_s, 1, s_blk), 2))
            e = jnp.where(sid < s_total, e, jnp.float32(-1e30))
        # Softmax over the full (padded) sequence axis = axes (0, 2).
        m = jnp.max(e, axis=2, keepdims=True)                 # lane reduce (XLU)
        m = jnp.max(m, axis=0, keepdims=True)                 # (1, tb, 1)
        p = jnp.exp(e - m)
        d = jnp.sum(p, axis=2, keepdims=True)
        d = jnp.sum(d, axis=0, keepdims=True)                 # (1, tb, 1)
        inv = pl.reciprocal(d, approx=True)                   # EUP slot (otherwise idle)
        inv = inv * (2.0 - d * inv)                           # Newton step -> ~f32 accuracy
        out_ref[...] = (p * inv).astype(out_ref.dtype)


# ---------------------------------------------------------------------------
# VMEM-aware tiling
# ---------------------------------------------------------------------------
def _round_up(x, m):
    return ((x + m - 1) // m) * m


def _vmem_capacity_bytes():
    try:
        return int(pltpu.get_tpu_info().vmem_capacity_bytes)
    except Exception:
        return 64 * 1024 * 1024          # v7x has the smallest VMEM; safe default


def _block_footprint(tb, s_blk, s_pad, H, enc_bytes):
    """Approximate VMEM bytes used by one pipelined grid step."""
    lanes_h = _round_up(H, 128)
    lanes_s = _round_up(s_blk, 128)
    num_s = s_pad // s_blk
    enc = 2 * s_blk * tb * lanes_h * enc_bytes    # double-buffered enc block
    q = 2 * tb * lanes_h * 4                      # double-buffered query block
    out = 2 * num_s * tb * lanes_s * 4            # output block
    acc = num_s * tb * lanes_s * 4                # energy accumulator scratch
    stage = s_blk * _round_up(tb, 128) * 4        # staging scratch
    return enc + q + out + acc + stage


def _choose_tiling(S, B, H, enc_bytes):
    physical = _vmem_capacity_bytes()
    vmem_limit = int(physical * 0.8)
    budget = int(physical * 0.55)                 # leave headroom for compiler scratch

    Bp = _round_up(B, 8)
    tb = 8

    # Largest S chunk (multiple of 8) whose footprint fits the budget; prefer
    # covering the whole sequence in one chunk (single-step softmax).
    s_full = _round_up(S, 8)
    if _block_footprint(tb, s_full, s_full, H, enc_bytes) <= budget:
        s_blk = s_full
    else:
        s_blk = 8
        while (s_blk + 8 <= s_full
               and _block_footprint(tb, s_blk + 8, _round_up(S, s_blk + 8),
                                    H, enc_bytes) <= budget):
            s_blk += 8
    s_pad = _round_up(S, s_blk)

    # Grow the batch tile while it fits and the parallel (batch) grid axis
    # keeps >= 2 steps, so both v7x TensorCores get work.
    while (Bp % (tb * 2) == 0 and Bp // (tb * 2) >= 2
           and _block_footprint(tb * 2, s_blk, s_pad, H, enc_bytes) <= budget):
        tb *= 2

    # In-kernel sub-chunk: bound the live vreg set of multiply+reduce to
    # ~128 KiB; must be a multiple of 8 that divides s_blk.
    ss = max(8, min(s_blk, (128 * 1024 // max(1, tb * H * 4)) // 8 * 8))
    while s_blk % ss:
        ss -= 8

    return Bp, tb, s_blk, s_pad, ss, vmem_limit


# ---------------------------------------------------------------------------
# Wrapper
# ---------------------------------------------------------------------------
def attn_general(hidden, encoder_outputs, W, bias, *, force_pallas=False,
                 _tiling_override=None):
    """Forward of Attn(method='general').

    hidden:          (1, B, H)
    encoder_outputs: (S, B, H)   native layout; bf16 accepted (halves HBM traffic)
    W:               (H, H)      nn.Linear weight (out_features, in_features)
    bias:            (H,)        nn.Linear bias
    returns:         (B, 1, S)   float32 softmax attention weights
    """
    S, B, H = encoder_outputs.shape
    del bias  # hidden . bias is constant over S -> cancels in the softmax.

    # Fold the Linear into the query:  e[b,s] = (hid[b] @ W) . enc[s,b]  (+ const).
    q = jnp.matmul(hidden[0].astype(jnp.float32), W.astype(jnp.float32))   # (B, H)

    # Tiny problems: pallas_call fixed overhead dominates; plain XLA is as fast.
    if not force_pallas and S * B * H <= (1 << 15):
        e = jnp.einsum("bh,sbh->bs", q, encoder_outputs.astype(jnp.float32))
        return jax.nn.softmax(e, axis=-1)[:, None, :]

    enc_bytes = jnp.dtype(encoder_outputs.dtype).itemsize
    if _tiling_override is not None:
        tb, s_blk, ss = _tiling_override
        assert tb % 8 == 0 and ss % 8 == 0 and s_blk % ss == 0
        Bp = _round_up(B, tb)
        s_pad = _round_up(S, s_blk)
        vmem_limit = int(_vmem_capacity_bytes() * 0.8)
    else:
        Bp, tb, s_blk, s_pad, ss, vmem_limit = _choose_tiling(S, B, H, enc_bytes)
    num_s = s_pad // s_blk

    if Bp != B:
        q = jnp.pad(q, ((0, Bp - B), (0, 0)))
    if Bp != B or s_pad != S:
        encoder_outputs = jnp.pad(encoder_outputs,
                                  ((0, s_pad - S), (0, Bp - B), (0, 0)))

    kernel = functools.partial(_attn_kernel, ss=ss, s_total=S)

    out3 = pl.pallas_call(
        kernel,
        out_shape=jax.ShapeDtypeStruct((num_s, Bp, s_blk), jnp.float32),
        grid_spec=pltpu.PrefetchScalarGridSpec(
            num_scalar_prefetch=0,
            grid=(Bp // tb, num_s),
            in_specs=[
                # folded query: resident per batch tile
                pl.BlockSpec((tb, H), lambda i, j: (i, 0)),
                # encoder outputs, native (S, B, H) layout, streamed over S
                pl.BlockSpec((s_blk, tb, H), lambda i, j: (j, i, 0)),
            ],
            # lane-dense (.., s_blk) output, written once per batch tile
            out_specs=pl.BlockSpec((num_s, tb, s_blk), lambda i, j: (0, i, 0)),
            scratch_shapes=[
                pltpu.VMEM((s_blk, tb), jnp.float32),          # staging
                pltpu.VMEM((num_s, tb, s_blk), jnp.float32),   # energy accumulator
            ],
        ),
        compiler_params=pltpu.CompilerParams(
            dimension_semantics=("parallel", "arbitrary"),
            vmem_limit_bytes=vmem_limit,
        ),
    )(q, encoder_outputs)

    # (num_s, Bp, s_blk) -> (B, S): cheap XLA reshuffle (factor-H smaller than enc).
    out = jnp.transpose(out3, (1, 0, 2)).reshape(Bp, s_pad)[:B, :S]
    return out[:, None, :]


def attn_general_ref(hidden, encoder_outputs, W, bias):
    """Pure-JAX reference mirroring the PyTorch loop (includes the bias)."""
    enc = encoder_outputs.astype(jnp.float32)
    energy = jnp.einsum("sbh,oh->sbo", enc, W.astype(jnp.float32)) + bias
    e = jnp.einsum("bh,sbh->bs", hidden[0].astype(jnp.float32), energy)
    return jax.nn.softmax(e, axis=-1)[:, None, :]


# ---------------------------------------------------------------------------
# Self-test
# ---------------------------------------------------------------------------
if __name__ == "__main__":
    key = jax.random.PRNGKey(0)
    k1, k2, k3, k4 = jax.random.split(key, 4)

    S, B, H = 8, 2, 32
    hidden = jax.random.normal(k1, (1, B, H), dtype=jnp.float32)
    enc = jax.random.normal(k2, (S, B, H), dtype=jnp.float32)
    bound = 1.0 / (H ** 0.5)
    W = jax.random.uniform(k3, (H, H), minval=-bound, maxval=bound, dtype=jnp.float32)
    bias = jax.random.uniform(k4, (H,), minval=-bound, maxval=bound, dtype=jnp.float32)

    # 1) Primary test: single S chunk, padded batch (2 -> 8).
    out = jax.block_until_ready(attn_general(hidden, enc, W, bias, force_pallas=True))
    ref = attn_general_ref(hidden, enc, W, bias)
    assert out.shape == (B, 1, S), out.shape
    assert jnp.allclose(out, ref, atol=1e-4, rtol=1e-4), "mismatch (primary)"

    # 2) Multi-S-chunk + padded seq/batch path (tiny tiles forced).
    S2, B2 = 20, 5
    hidden2 = jax.random.normal(k1, (1, B2, H), dtype=jnp.float32)
    enc2 = jax.random.normal(k2, (S2, B2, H), dtype=jnp.float32)
    out2 = jax.block_until_ready(
        attn_general(hidden2, enc2, W, bias, force_pallas=True,
                     _tiling_override=(8, 8, 8)))
    ref2 = attn_general_ref(hidden2, enc2, W, bias)
    assert out2.shape == (B2, 1, S2), out2.shape
    assert jnp.allclose(out2, ref2, atol=1e-4, rtol=1e-4), "mismatch (multi-chunk)"

    # 3) bf16 encoder stream (halves HBM traffic on the dominant input).
    out3 = jax.block_until_ready(
        attn_general(hidden, enc.astype(jnp.bfloat16), W, bias, force_pallas=True))
    ref3 = attn_general_ref(hidden, enc.astype(jnp.bfloat16), W, bias)
    assert jnp.allclose(out3, ref3, atol=1e-3, rtol=1e-3), "mismatch (bf16 enc)"

    print("KERNEL_OK")
</pallas_src>

<mosaic_0001>
module attributes {stable_mosaic.version = 11 : i64} {
  func.func @_attn_kernel(%arg0: i32, %arg1: i32, %arg2: memref<8x32xf32, #tpu.memory_space<vmem>>, %arg3: memref<8x8x32xf32, #tpu.memory_space<vmem>>, %arg4: memref<1x8x8xf32, #tpu.memory_space<vmem>>, %arg5: memref<8x8xf32, #tpu.memory_space<vmem>>, %arg6: memref<1x8x8xf32, #tpu.memory_space<vmem>>) attributes {dimension_semantics = [#tpu.dimension_semantics<parallel>, #tpu.dimension_semantics<arbitrary>], iteration_bounds = array<i64: 1, 1>, scalar_prefetch = 0 : i64, scratch_operands = 2 : i64, tpu.core_type = #tpu.core_type<tc>, window_params = [{transform_indices = @transform_0, window_bounds = array<i64: 8, 32>}, {transform_indices = @transform_1, window_bounds = array<i64: 8, 8, 32>}, {transform_indices = @transform_2, window_bounds = array<i64: 1, 8, 8>}]} {
    %c0 = arith.constant 0 : index
    %c0_0 = arith.constant 0 : index
    %0 = vector.load %arg2[%c0, %c0_0] : memref<8x32xf32, #tpu.memory_space<vmem>>, vector<8x32xf32>
    %c0_i32 = arith.constant 0 : i32
    %c8_i32 = arith.constant 8 : i32
    %1 = arith.muli %c0_i32, %c8_i32 : i32
    %2 = tpu.assume_multiple %1, 8 : i32
    %3 = arith.index_cast %2 : i32 to index
    %c0_1 = arith.constant 0 : index
    %c0_2 = arith.constant 0 : index
    %4 = vector.load %arg3[%3, %c0_1, %c0_2] : memref<8x8x32xf32, #tpu.memory_space<vmem>>, vector<8x8x32xf32>
    %5 = vector.shape_cast %0 : vector<8x32xf32> to vector<1x8x32xf32>
    %6 = vector.broadcast %5 : vector<1x8x32xf32> to vector<8x8x32xf32>
    %7 = arith.mulf %4, %6 : vector<8x8x32xf32>
    %cst = arith.constant dense<0.000000e+00> : vector<8x8xf32>
    %8 = vector.multi_reduction <add>, %7, %cst [2] : vector<8x8x32xf32> to vector<8x8xf32>
    %9 = arith.index_cast %2 : i32 to index
    %c0_3 = arith.constant 0 : index
    %10 = vector.load %arg5[%9, %c0_3] : memref<8x8xf32, #tpu.memory_space<vmem>>, vector<8x8xf32>
    tpu.vector_store %arg5[%9, %c0_3], %8 {strides = array<i32>} : memref<8x8xf32, #tpu.memory_space<vmem>>, vector<8x8xf32>,
    %c1_i32 = arith.constant 1 : i32
    %c0_4 = arith.constant 0 : index
    %c0_5 = arith.constant 0 : index
    %11 = vector.load %arg5[%c0_4, %c0_5] : memref<8x8xf32, #tpu.memory_space<vmem>>, vector<8x8xf32>
    %12 = tpu.transpose %11, [1, 0] : vector<8x8xf32> -> vector<8x8xf32>
    %13 = vector.shape_cast %12 : vector<8x8xf32> to vector<1x8x8xf32>
    %14 = arith.index_cast %arg1 : i32 to index
    %c0_6 = arith.constant 0 : index
    %c0_7 = arith.constant 0 : index
    %15 = vector.load %arg6[%14, %c0_6, %c0_7] : memref<1x8x8xf32, #tpu.memory_space<vmem>>, vector<1x8x8xf32>
    tpu.vector_store %arg6[%14, %c0_6, %c0_7], %13 {strides = array<i32>} : memref<1x8x8xf32, #tpu.memory_space<vmem>>, vector<1x8x8xf32>,
    %c0_i32_8 = arith.constant 0 : i32
    %16 = arith.cmpi eq, %arg1, %c0_i32_8 : i32
    %17 = arith.extui %16 : i1 to i32
    %c0_i32_9 = arith.constant 0 : i32
    %18 = arith.cmpi ne, %17, %c0_i32_9 : i32
    scf.if %18 {
      %c0_10 = arith.constant 0 : index
      %c0_11 = arith.constant 0 : index
      %c0_12 = arith.constant 0 : index
      %19 = vector.load %arg6[%c0_10, %c0_11, %c0_12] : memref<1x8x8xf32, #tpu.memory_space<vmem>>, vector<1x8x8xf32>
      %cst_13 = arith.constant dense<0xFF800000> : vector<1x8xf32>
      %20 = vector.multi_reduction <maximumf>, %19, %cst_13 [2] : vector<1x8x8xf32> to vector<1x8xf32>
      %21 = vector.shape_cast %20 : vector<1x8xf32> to vector<1x8x1xf32>
      %cst_14 = arith.constant dense<0xFF800000> : vector<8x1xf32>
      %22 = vector.multi_reduction <maximumf>, %21, %cst_14 [0] : vector<1x8x1xf32> to vector<8x1xf32>
      %23 = vector.shape_cast %22 : vector<8x1xf32> to vector<1x8x1xf32>
      %24 = vector.broadcast %23 : vector<1x8x1xf32> to vector<1x8x8xf32>
      %25 = arith.subf %19, %24 : vector<1x8x8xf32>
      %26 = math.exp %25 : vector<1x8x8xf32>
      %cst_15 = arith.constant dense<0.000000e+00> : vector<1x8xf32>
      %27 = vector.multi_reduction <add>, %26, %cst_15 [2] : vector<1x8x8xf32> to vector<1x8xf32>
      %28 = vector.shape_cast %27 : vector<1x8xf32> to vector<1x8x1xf32>
      %cst_16 = arith.constant dense<0.000000e+00> : vector<8x1xf32>
      %29 = vector.multi_reduction <add>, %28, %cst_16 [0] : vector<1x8x1xf32> to vector<8x1xf32>
      %30 = vector.shape_cast %29 : vector<8x1xf32> to vector<1x8x1xf32>
      %31 = tpu.reciprocal %30 {approx = true} : vector<1x8x1xf32> -> vector<1x8x1xf32>
      %32 = arith.mulf %30, %31 : vector<1x8x1xf32>
      %cst_17 = arith.constant 2.000000e+00 : f32
      %33 = vector.broadcast %cst_17 : f32 to vector<1x8x1xf32>
      %34 = arith.subf %33, %32 : vector<1x8x1xf32>
      %35 = arith.mulf %31, %34 : vector<1x8x1xf32>
      %36 = vector.broadcast %35 : vector<1x8x1xf32> to vector<1x8x8xf32>
      %37 = arith.mulf %26, %36 : vector<1x8x8xf32>
      %c0_18 = arith.constant 0 : index
      %c0_19 = arith.constant 0 : index
      %c0_20 = arith.constant 0 : index
      %38 = vector.load %arg4[%c0_18, %c0_19, %c0_20] : memref<1x8x8xf32, #tpu.memory_space<vmem>>, vector<1x8x8xf32>
      tpu.vector_store %arg4[%c0_18, %c0_19, %c0_20], %37 {strides = array<i32>} : memref<1x8x8xf32, #tpu.memory_space<vmem>>, vector<1x8x8xf32>,
    } else {
    }
    return
  }
  func.func @transform_0(%arg0: i32, %arg1: i32) -> (i32, i32) {
    %c0_i32 = arith.constant 0 : i32
    %c0_i32_0 = arith.constant 0 : i32
    return %arg0, %c0_i32 : i32, i32
  }
  func.func @transform_1(%arg0: i32, %arg1: i32) -> (i32, i32, i32) {
    %c0_i32 = arith.constant 0 : i32
    %c0_i32_0 = arith.constant 0 : i32
    return %arg1, %arg0, %c0_i32 : i32, i32, i32
  }
  func.func @transform_2(%arg0: i32, %arg1: i32) -> (i32, i32, i32) {
    %c0_i32 = arith.constant 0 : i32
    %c0_i32_0 = arith.constant 0 : i32
    %c0_i32_1 = arith.constant 0 : i32
    return %c0_i32, %arg0, %c0_i32_0 : i32, i32, i32
  }
}

</mosaic_0001>

<llo_original>
// kernel: tpu_custom_call.1
$region0: #{tpu_custom_call.1}
  #allocation0 [shape = 'u32[]', space=smem, size = 0x4, offset = 0x4, fixed_abs, tag = 'smem constant byte address 0x4 - core index']
  #allocation1 [shape = 'u32[144,128]{1,0:T(1,128)}', space=vmem, size = 0x12000, scoped, tag = 'internal scratch']
  #allocation2 [shape = 'f32[8,8]{1,0:T(8,128)}', space=vmem, size = 0x1000, scoped, tag = 'scratch operand']
  #allocation3 [shape = 'f32[1,8,8]{2,1,0:T(8,128)}', space=vmem, size = 0x1000, scoped, tag = 'scratch operand']
  %s0 = inlined_call_operand.hbm [shape: f32[8,32], index: 0, kind: input, shape index: {}]
  %s1 = inlined_call_operand.hbm [shape: f32[8,8,32], index: 1, kind: input, shape index: {}]
  %s2 = inlined_call_operand.hbm [shape: f32[1,8,8], index: 2, kind: output, shape index: {}]
  %s3 = sld [smem:[#allocation0]]
  $region30: #{tpu_custom_call.1} parent=0
    _
  %s5 = ssub.s32 1, %s3
  %s6 = scalar_select 0, %s5, %s3
  $region1: #{tpu_custom_call.1} parent=0
    #allocation4 [shape = 'u8[4096]{0}', space=vmem, size = 0x1000, scoped, tag = 'input window, operand 0, single buffered']
    #allocation5 [shape = 's32[1]{0}', space=sflag, size = 0x4, scoped, tag = 'scoped memory for tpu_custom_call.1']
    #allocation6 [shape = 's32[1]{0}', space=sflag, size = 0x4, scoped, tag = 'scoped memory for tpu_custom_call.1']
    #allocation7 [shape = 'u8[32768]{0}', space=vmem, size = 0x8000, scoped, tag = 'input window, operand 1, single buffered']
    #allocation8 [shape = 's32[1]{0}', space=sflag, size = 0x4, scoped, tag = 'scoped memory for tpu_custom_call.1']
    #allocation9 [shape = 'u8[4096]{0}', space=vmem, size = 0x1000, scoped, tag = 'output window, operand 0, single buffered']
    %7 = vsyncpa [#allocation5], 0
    %8 = vsyncpa [#allocation8], 0
    %9 = vsyncpa [#allocation6], 0
    // Predicated region
    $region2: #{tpu_custom_call.1} parent=1 // pred_check
      _
    $region3: #{tpu_custom_call.1} parent=1 // pred_check_branch
      %11 = sbr.rel (0) target = $region5
    $region4: #{tpu_custom_call.1} parent=1 // pred_region
      %s13 = ssub.s32 128, 128
      %14 = vsyncadd [#allocation5], %s13
      %s16 = sshll.u32 [#allocation4], 4
      %s17 = int_to_ptr.vmem [resolvable:$true] %s16
      %19 = dma.hbm_to_vmem [thread:$0]  %s0, 128, %s17, [#allocation5]
    $region5: #{tpu_custom_call.1} parent=1 // pred_fallthru
      _
    // Predicated region
    $region6: #{tpu_custom_call.1} parent=1 // pred_check
      _
    $region7: #{tpu_custom_call.1} parent=1 // pred_check_branch
      %21 = sbr.rel (0) target = $region9
    $region8: #{tpu_custom_call.1} parent=1 // pred_region
      %s23 = ssub.s32 1024, 1024
      %24 = vsyncadd [#allocation8], %s23
      %s25 = sshll.u32 [#allocation7], 4
      %s26 = int_to_ptr.vmem [resolvable:$true] %s25
      %31 = dma.hbm_to_vmem [thread:$0]  %s1, 1024, %s26, [#allocation8], 128, 128, 8
    $region9: #{tpu_custom_call.1} parent=1 // pred_fallthru
      _
    // Predicated region
    $region10: #{tpu_custom_call.1} parent=1 // pred_check
      _
    $region11: #{tpu_custom_call.1} parent=1 // pred_check_branch
      %33 = sbr.rel (0) target = $region13
    $region12: #{tpu_custom_call.1} parent=1 // pred_region
      %34 = dma.done [#allocation5], 128
    $region13: #{tpu_custom_call.1} parent=1 // pred_fallthru
      _
    // Predicated region
    $region14: #{tpu_custom_call.1} parent=1 // pred_check
      _
    $region15: #{tpu_custom_call.1} parent=1 // pred_check_branch
      %36 = sbr.rel (0) target = $region17
    $region16: #{tpu_custom_call.1} parent=1 // pred_region
      %37 = dma.done [#allocation8], 1024
    $region17: #{tpu_custom_call.1} parent=1 // pred_fallthru
      _
    %v38 = vld [vmem:[#allocation4] sm:$0xff]
    %s39 = smul.u32 0, 8
    %s40 = scalar_lea.vmem [#allocation7], %s39
    %v41 = vld [vmem:[%s40] sm:$0xff]
    %v42 = vld [vmem:[%s40 + $0x8] sm:$0xff]
    %v43 = vld [vmem:[%s40 + $0x10] sm:$0xff]
    %v44 = vld [vmem:[%s40 + $0x18] sm:$0xff]
    %v45 = vld [vmem:[%s40 + $0x20] sm:$0xff]
    %v46 = vld [vmem:[%s40 + $0x28] sm:$0xff]
    %v47 = vld [vmem:[%s40 + $0x30] sm:$0xff]
    %v48 = vld [vmem:[%s40 + $0x38] sm:$0xff]
    %v49 = vmul.f32 %v41, %v38
    %v50 = vmul.f32 %v42, %v38
    %v51 = vmul.f32 %v43, %v38
    %v52 = vmul.f32 %v44, %v38
    %v53 = vmul.f32 %v45, %v38
    %v54 = vmul.f32 %v46, %v38
    %v55 = vmul.f32 %v47, %v38
    %v56 = vmul.f32 %v48, %v38
    %vm57 = vcmask 261120
    %v58 = vsel %vm57, %v49, 0.0
    %59 = vadd.xlane.f32.xlu0 %v58
    %v60 = vpop.xlane.xlu0 %59
    %v61 = vsel %vm57, %v50, 0.0
    %62 = vadd.xlane.f32.xlu0 %v61
    %v63 = vpop.xlane.xlu0 %62
    %v64 = vsel %vm57, %v51, 0.0
    %65 = vadd.xlane.f32.xlu0 %v64
    %v66 = vpop.xlane.xlu0 %65
    %v67 = vsel %vm57, %v52, 0.0
    %68 = vadd.xlane.f32.xlu0 %v67
    %v69 = vpop.xlane.xlu0 %68
    %v70 = vsel %vm57, %v53, 0.0
    %71 = vadd.xlane.f32.xlu0 %v70
    %v72 = vpop.xlane.xlu0 %71
    %v73 = vsel %vm57, %v54, 0.0
    %74 = vadd.xlane.f32.xlu0 %v73
    %v75 = vpop.xlane.xlu0 %74
    %v76 = vsel %vm57, %v55, 0.0
    %77 = vadd.xlane.f32.xlu0 %v76
    %v78 = vpop.xlane.xlu0 %77
    %v79 = vsel %vm57, %v56, 0.0
    %80 = vadd.xlane.f32.xlu0 %v79
    %v81 = vpop.xlane.xlu0 %80
    %v90 = vlaneseq
    %v91 = vand.u32 %v90, 127
    %v92 = vlaneseq
    %v93 = vshrl.u32 %v92, 7
    %v94 = vsub.s32 %v91, %v93
    %v95 = vrot.slane %v60, %v94
    %v96 = vlaneseq
    %v97 = vshrl.u32 %v96, 7
    %v98 = vsub.s32 %v91, %v97
    %v99 = vrot.slane %v63, %v98
    %v100 = vlaneseq
    %v101 = vshrl.u32 %v100, 7
    %v102 = vsub.s32 %v91, %v101
    %v103 = vrot.slane %v66, %v102
    %v104 = vlaneseq
    %v105 = vshrl.u32 %v104, 7
    %v106 = vsub.s32 %v91, %v105
    %v107 = vrot.slane %v69, %v106
    %v108 = vlaneseq
    %v109 = vshrl.u32 %v108, 7
    %v110 = vsub.s32 %v91, %v109
    %v111 = vrot.slane %v72, %v110
    %v112 = vlaneseq
    %v113 = vshrl.u32 %v112, 7
    %v114 = vsub.s32 %v91, %v113
    %v115 = vrot.slane %v75, %v114
    %v116 = vlaneseq
    %v117 = vshrl.u32 %v116, 7
    %v118 = vsub.s32 %v91, %v117
    %v119 = vrot.slane %v78, %v118
    %v120 = vlaneseq
    %v121 = vshrl.u32 %v120, 7
    %v122 = vsub.s32 %v91, %v121
    %v123 = vrot.slane %v81, %v122
    %vm124 = vcmask 1041409
    %v125 = vsel %vm124, %v99, %v95
    %vm126 = vcmask 1042434
    %v127 = vsel %vm126, %v103, %v125
    %vm128 = vcmask 1043459
    %v129 = vsel %vm128, %v107, %v127
    %vm130 = vcmask 1044484
    %v131 = vsel %vm130, %v111, %v129
    %vm132 = vcmask 1045509
    %v133 = vsel %vm132, %v115, %v131
    %vm134 = vcmask 1046534
    %v135 = vsel %vm134, %v119, %v133
    %vm136 = vcmask 1047559
    %v137 = vsel %vm136, %v123, %v135
    %vm139 = vcmask 64512
    %140 = vst.msk [vmem:[#allocation2] sm:$0xff] %vm139, %v137
    %v141 = vld [vmem:[#allocation2] sm:$0xff]
    %142 = vxpose.xlu0.b32.start [1/16] %v141, 128
    %143 = vxpose.xlu0.b32.cont [2/16] 0.0, 128
    %144 = vxpose.xlu0.b32.cont [3/16] 0.0, 128
    %145 = vxpose.xlu0.b32.cont [4/16] 0.0, 128
    %146 = vxpose.xlu0.b32.cont [5/16] 0.0, 128
    %147 = vxpose.xlu0.b32.cont [6/16] 0.0, 128
    %148 = vxpose.xlu0.b32.cont [7/16] 0.0, 128
    %149 = vxpose.xlu0.b32.cont [8/16] 0.0, 128
    %150 = vxpose.xlu0.b32.cont [9/16] 0.0, 128
    %151 = vxpose.xlu0.b32.cont [10/16] 0.0, 128
    %152 = vxpose.xlu0.b32.cont [11/16] 0.0, 128
    %153 = vxpose.xlu0.b32.cont [12/16] 0.0, 128
    %154 = vxpose.xlu0.b32.cont [13/16] 0.0, 128
    %155 = vxpose.xlu0.b32.cont [14/16] 0.0, 128
    %156 = vxpose.xlu0.b32.cont [15/16] 0.0, 128
    %157 = vxpose.xlu0.b32.end [16/16] 0.0, 128
    %v158 = vpop.trf.xlu0
    %v159 = vpop.trf.xlu0
    %v160 = vpop.trf.xlu0
    %v161 = vpop.trf.xlu0
    %v162 = vpop.trf.xlu0
    %v163 = vpop.trf.xlu0
    %v164 = vpop.trf.xlu0
    %v165 = vpop.trf.xlu0
    %v166 = vpop.trf.xlu0
    %v167 = vpop.trf.xlu0
    %v168 = vpop.trf.xlu0
    %v169 = vpop.trf.xlu0
    %v170 = vpop.trf.xlu0
    %v171 = vpop.trf.xlu0
    %v172 = vpop.trf.xlu0
    %v173 = vpop.trf.xlu0
    %s174 = smul.u32 0, 8
    %s175 = scalar_lea.vmem [#allocation3], %s174
    %176 = vst.msk [vmem:[%s175] sm:$0xff] %vm139, %v158
    %p177 = scmp.eq.s32.totalorder 0, 0
    // Predicated region
    $region18: #{tpu_custom_call.1} parent=1 // pred_check
      %p178 = pneg %p177
    $region19: #{tpu_custom_call.1} parent=1 // pred_check_branch
      %180 = sbr.rel (%p178) target = $region21
    $region20: #{tpu_custom_call.1} parent=1 // pred_region
      %v181 = vld [vmem:[#allocation3] sm:$0xff]
      %v182 = vsel %vm139, %v181, -inf
      %183 = vmax.xlane.f32.xlu0 %v182
      %v184 = vpop.xlane.xlu0 %183
      %v185 = vsub.f32 %v181, %v184
      %v186 = vmul.f32 %v185, 1.442695
      %v187 = vpow.pop %v186
      %v188 = vsel %vm139, %v187, 0.0
      %189 = vadd.xlane.f32.xlu0 %v188
      %v190 = vpop.xlane.xlu0 %189
      %v191 = vadd.f32 %v190, 0.0
      %v192 = vrcp.pop %v191
      %v193 = vmul.f32 %v191, %v192
      %v194 = vsub.f32 2.0, %v193
      %v195 = vmul.f32 %v192, %v194
      %v196 = vmul.f32 %v187, %v195
      %197 = vst.msk [vmem:[#allocation9] sm:$0xff] %vm139, %v196
    $region21: #{tpu_custom_call.1} parent=1 // pred_fallthru
      _
    // Predicated region
    $region22: #{tpu_custom_call.1} parent=1 // pred_check
      _
    $region23: #{tpu_custom_call.1} parent=1 // pred_check_branch
      %199 = sbr.rel (0) target = $region25
    $region24: #{tpu_custom_call.1} parent=1 // pred_region
      %s201 = ssub.s32 128, 128
      %202 = vsyncadd [#allocation6], %s201
      %s204 = sshll.u32 [#allocation9], 4
      %s205 = int_to_ptr.vmem [resolvable:$true] %s204
      %207 = dma.vmem_to_hbm [thread:$0]  %s205, 128, %s2, [#allocation6]
    $region25: #{tpu_custom_call.1} parent=1 // pred_fallthru
      _
    // Predicated region
    $region26: #{tpu_custom_call.1} parent=1 // pred_check
      _
    $region27: #{tpu_custom_call.1} parent=1 // pred_check_branch
      %209 = sbr.rel (0) target = $region29
    $region28: #{tpu_custom_call.1} parent=1 // pred_region
      %210 = dma.done [#allocation6], 128
    $region29: #{tpu_custom_call.1} parent=1 // pred_fallthru
      _
    %211 = vsyncpa [#allocation5], 1
    %212 = vsyncpa [#allocation8], 1
    %213 = vsyncpa [#allocation6], 1

</llo_original>
